<compile_context>
chip_gen: v7x
topology: tpu7x:2x2x1
jax: 0.10.0
libtpu: 0.0.40
codegen_flags: <defaults>
</compile_context>

<pallas_src>
import jax
import jax.numpy as jnp
from jax.experimental import pallas as pl
from jax.experimental.pallas import tpu as pltpu

EPSILON = 1e-07
LANES = 128
SUBLANES = 8
ROW_ALIGN = 32  # int8 label packing: keep row tiles a multiple of 32 sublanes


def _cdiv(a, b):
    return -(-a // b)


def _make_f1_kernel(classes, tile_rows, needs_mask, epsilon):
    """Kernel body for a fixed (classes, tile_rows) configuration."""
    groups = tile_rows // SUBLANES

    def fold(x):
        # (tile_rows, 128) -> (8, 128): pure-VPU partial reduction.  The
        # reshape regroups whole (8,128) vreg tiles (no tile-boundary cross).
        return jnp.sum(x.reshape(groups, SUBLANES, LANES), axis=0)

    def kernel(pred_ref, lab_ref, out_ref, acc_tp, acc_pred, acc_true):
        # ---- init accumulators on the first grid step --------------------
        @pl.when(pl.program_id(0) == 0)
        def _init():
            acc_tp[...] = jnp.zeros_like(acc_tp)
            acc_pred[...] = jnp.zeros_like(acc_pred)
            acc_true[...] = jnp.zeros_like(acc_true)

        # ---- per-tile streaming work --------------------------------------
        lab = lab_ref[...].astype(jnp.int32)          # (rows, 128); pad = -1
        planes = [pred_ref[c].astype(jnp.float32) for c in range(classes)]

        # softmax across the class planes: elementwise across dense planes
        m = planes[0]
        for c in range(1, classes):
            m = jnp.maximum(m, planes[c])
        es = [jnp.exp(p - m) for p in planes]
        denom = es[0]
        for c in range(1, classes):
            denom = denom + es[c]
        inv = pl.reciprocal(denom, approx=False)       # exact: keep 1e-5 agreement

        if needs_mask:
            valid = lab >= 0                           # padded samples -> False

        for c in range(classes):
            sm_c = es[c] * inv                         # softmax prob of class c
            hot_c = (lab == c).astype(jnp.float32)     # 0 on padded samples
            sm_masked = jnp.where(valid, sm_c, 0.0) if needs_mask else sm_c
            acc_tp[c] += fold(hot_c * sm_c)            # -> tp
            acc_pred[c] += fold(sm_masked)             # -> tp + fp
            acc_true[c] += fold(hot_c)                 # -> tp + fn

        # ---- finalize on the last grid step -------------------------------
        @pl.when(pl.program_id(0) == pl.num_programs(0) - 1)
        def _finalize():
            def total(ref):
                s = jnp.sum(ref[...], axis=2)                   # (C, 8)
                return jnp.sum(s, axis=1, keepdims=True)        # (C, 1)

            tp = total(acc_tp)
            col_pred = total(acc_pred)
            col_true = total(acc_true)
            precision = tp / (col_pred + epsilon)
            recall = tp / (col_true + epsilon)
            f1 = 2.0 * precision * recall / (precision + recall + epsilon)
            f1 = jnp.clip(f1, epsilon, 1.0 - epsilon)
            loss = 1.0 - jnp.sum(f1) / classes
            out_ref[...] = jnp.full((1, 1), loss, dtype=jnp.float32)

    return kernel


def f1_loss(y_pred, y_true, classes=3, epsilon=EPSILON, tile_samples=131072):
    """y_pred: (N, C) float, y_true: (N,) int -> scalar f32 loss."""
    assert y_pred.ndim == 2
    assert y_true.ndim == 1
    n, c = y_pred.shape
    assert c == classes
    assert y_true.shape[0] == n
    assert classes < 128, "int8 label path assumes classes < 128"

    # ---- choose row tiling (batch folded onto sublanes x lanes) ----------
    rows_needed = _cdiv(n, LANES)
    rows_needed = _cdiv(rows_needed, ROW_ALIGN) * ROW_ALIGN
    max_tile_rows = max(ROW_ALIGN, (tile_samples // LANES) // ROW_ALIGN * ROW_ALIGN)
    if rows_needed <= max_tile_rows:
        tile_rows, grid_n = rows_needed, 1
    else:
        tile_rows = max_tile_rows
        grid_n = _cdiv(rows_needed, tile_rows)
    total_rows = grid_n * tile_rows
    n_pad = total_rows * LANES
    needs_mask = n_pad != n

    # ---- relayout to dense planes (layout plumbing only) ------------------
    # TODO(synk): emit class-major logits upstream to drop this transpose copy.
    pred_t = jnp.transpose(y_pred)                               # (C, N)
    pred_t = jnp.pad(pred_t, ((0, 0), (0, n_pad - n)))           # pad logits = 0
    pred_t = pred_t.reshape(classes, total_rows, LANES)
    labels = jnp.pad(y_true.astype(jnp.int8), (0, n_pad - n),
                     constant_values=-1)                         # pad labels = -1
    labels = labels.reshape(total_rows, LANES)

    kernel = _make_f1_kernel(classes, tile_rows, needs_mask, epsilon)

    out = pl.pallas_call(
        kernel,
        out_shape=jax.ShapeDtypeStruct((1, 1), jnp.float32),
        grid_spec=pltpu.PrefetchScalarGridSpec(
            num_scalar_prefetch=0,
            grid=(grid_n,),
            in_specs=[
                pl.BlockSpec((classes, tile_rows, LANES), lambda i: (0, i, 0)),
                pl.BlockSpec((tile_rows, LANES), lambda i: (i, 0)),
            ],
            out_specs=pl.BlockSpec((1, 1), lambda i: (0, 0)),
            scratch_shapes=[
                pltpu.VMEM((classes, SUBLANES, LANES), jnp.float32),  # tp
                pltpu.VMEM((classes, SUBLANES, LANES), jnp.float32),  # tp + fp
                pltpu.VMEM((classes, SUBLANES, LANES), jnp.float32),  # tp + fn
            ],
        ),
        compiler_params=pltpu.CompilerParams(
            dimension_semantics=("arbitrary",),        # batch reduction axis
            vmem_limit_bytes=32 * 1024 * 1024,
        ),
    )(pred_t, labels)
    return out[0, 0]


if __name__ == "__main__":
    key = jax.random.PRNGKey(0)
    k1, k2, k3, k4 = jax.random.split(key, 4)

    def reference(y_pred, y_true, classes):
        one_hot = jax.nn.one_hot(y_true, classes, dtype=jnp.float32)
        sm = jax.nn.softmax(y_pred.astype(jnp.float32), axis=1)
        tp = jnp.sum(one_hot * sm, axis=0)
        fp = jnp.sum((1.0 - one_hot) * sm, axis=0)
        fn = jnp.sum(one_hot * (1.0 - sm), axis=0)
        prec = tp / (tp + fp + EPSILON)
        rec = tp / (tp + fn + EPSILON)
        f1 = 2.0 * prec * rec / (prec + rec + EPSILON)
        f1 = jnp.clip(f1, EPSILON, 1.0 - EPSILON)
        return 1.0 - jnp.mean(f1)

    C = 3  # module default

    # Case 1: module-default toy shape (batch=8, classes=3) -> single block.
    N1 = 8
    yp1 = jax.random.normal(k1, (N1, C), dtype=jnp.float32)
    yt1 = jax.random.randint(k2, (N1,), 0, C, dtype=jnp.int32)
    loss1 = f1_loss(yp1, yt1, classes=C)
    jax.block_until_ready(loss1)
    ref1 = reference(yp1, yt1, C)
    assert jnp.allclose(loss1, ref1, atol=1e-5, rtol=1e-5), (loss1, ref1)

    # Case 2: exercises the multi-step grid + padded-tail (masked) path.
    N2 = 5000
    yp2 = jax.random.normal(k3, (N2, C), dtype=jnp.float32)
    yt2 = jax.random.randint(k4, (N2,), 0, C, dtype=jnp.int32)
    loss2 = f1_loss(yp2, yt2, classes=C, tile_samples=4096)
    jax.block_until_ready(loss2)
    ref2 = reference(yp2, yt2, C)
    assert jnp.allclose(loss2, ref2, atol=1e-5, rtol=1e-5), (loss2, ref2)

    print("KERNEL_OK")
</pallas_src>

<mosaic_0001>
module attributes {stable_mosaic.version = 11 : i64} {
  func.func @kernel(%arg0: i32, %arg1: memref<3x32x128xf32, #tpu.memory_space<vmem>>, %arg2: memref<32x128xi8, #tpu.memory_space<vmem>>, %arg3: memref<1x1xf32, #tpu.memory_space<vmem>>, %arg4: memref<3x8x128xf32, #tpu.memory_space<vmem>>, %arg5: memref<3x8x128xf32, #tpu.memory_space<vmem>>, %arg6: memref<3x8x128xf32, #tpu.memory_space<vmem>>) attributes {dimension_semantics = [#tpu.dimension_semantics<arbitrary>], iteration_bounds = array<i64: 1>, scalar_prefetch = 0 : i64, scratch_operands = 3 : i64, tpu.core_type = #tpu.core_type<tc>, window_params = [{transform_indices = @transform_0, window_bounds = array<i64: 3, 32, 128>}, {transform_indices = @transform_1, window_bounds = array<i64: 32, 128>}, {pipeline_mode = #tpu.pipeline_mode<synchronous>, transform_indices = @transform_2, window_bounds = array<i64: 1, 1>}]} {
    %c0_i32 = arith.constant 0 : i32
    %0 = arith.cmpi eq, %arg0, %c0_i32 : i32
    %1 = arith.extui %0 : i1 to i32
    %c0_i32_0 = arith.constant 0 : i32
    %2 = arith.cmpi ne, %1, %c0_i32_0 : i32
    scf.if %2 {
      %cst_78 = arith.constant 0.000000e+00 : f32
      %123 = vector.broadcast %cst_78 : f32 to vector<3x8x128xf32>
      %c0_79 = arith.constant 0 : index
      %c0_80 = arith.constant 0 : index
      %c0_81 = arith.constant 0 : index
      %124 = vector.load %arg4[%c0_79, %c0_80, %c0_81] : memref<3x8x128xf32, #tpu.memory_space<vmem>>, vector<3x8x128xf32>
      tpu.vector_store %arg4[%c0_79, %c0_80, %c0_81], %123 {strides = array<i32>} : memref<3x8x128xf32, #tpu.memory_space<vmem>>, vector<3x8x128xf32>,
      %cst_82 = arith.constant 0.000000e+00 : f32
      %125 = vector.broadcast %cst_82 : f32 to vector<3x8x128xf32>
      %c0_83 = arith.constant 0 : index
      %c0_84 = arith.constant 0 : index
      %c0_85 = arith.constant 0 : index
      %126 = vector.load %arg5[%c0_83, %c0_84, %c0_85] : memref<3x8x128xf32, #tpu.memory_space<vmem>>, vector<3x8x128xf32>
      tpu.vector_store %arg5[%c0_83, %c0_84, %c0_85], %125 {strides = array<i32>} : memref<3x8x128xf32, #tpu.memory_space<vmem>>, vector<3x8x128xf32>,
      %cst_86 = arith.constant 0.000000e+00 : f32
      %127 = vector.broadcast %cst_86 : f32 to vector<3x8x128xf32>
      %c0_87 = arith.constant 0 : index
      %c0_88 = arith.constant 0 : index
      %c0_89 = arith.constant 0 : index
      %128 = vector.load %arg6[%c0_87, %c0_88, %c0_89] : memref<3x8x128xf32, #tpu.memory_space<vmem>>, vector<3x8x128xf32>
      tpu.vector_store %arg6[%c0_87, %c0_88, %c0_89], %127 {strides = array<i32>} : memref<3x8x128xf32, #tpu.memory_space<vmem>>, vector<3x8x128xf32>,
    } else {
    }
    %c0 = arith.constant 0 : index
    %c0_1 = arith.constant 0 : index
    %3 = vector.load %arg2[%c0, %c0_1] : memref<32x128xi8, #tpu.memory_space<vmem>>, vector<32x128xi8>
    %4 = arith.extsi %3 : vector<32x128xi8> to vector<32x128xi32>
    %c0_2 = arith.constant 0 : index
    %c0_3 = arith.constant 0 : index
    %c0_4 = arith.constant 0 : index
    %5 = vector.load %arg1[%c0_2, %c0_3, %c0_4] : memref<3x32x128xf32, #tpu.memory_space<vmem>>, vector<1x32x128xf32>
    %6 = vector.shape_cast %5 : vector<1x32x128xf32> to vector<32x128xf32>
    %c1 = arith.constant 1 : index
    %c0_5 = arith.constant 0 : index
    %c0_6 = arith.constant 0 : index
    %7 = vector.load %arg1[%c1, %c0_5, %c0_6] : memref<3x32x128xf32, #tpu.memory_space<vmem>>, vector<1x32x128xf32>
    %8 = vector.shape_cast %7 : vector<1x32x128xf32> to vector<32x128xf32>
    %c2 = arith.constant 2 : index
    %c0_7 = arith.constant 0 : index
    %c0_8 = arith.constant 0 : index
    %9 = vector.load %arg1[%c2, %c0_7, %c0_8] : memref<3x32x128xf32, #tpu.memory_space<vmem>>, vector<1x32x128xf32>
    %10 = vector.shape_cast %9 : vector<1x32x128xf32> to vector<32x128xf32>
    %11 = arith.maximumf %6, %8 : vector<32x128xf32>
    %12 = arith.maximumf %11, %10 : vector<32x128xf32>
    %13 = arith.subf %6, %12 : vector<32x128xf32>
    %14 = math.exp %13 : vector<32x128xf32>
    %15 = arith.subf %8, %12 : vector<32x128xf32>
    %16 = math.exp %15 : vector<32x128xf32>
    %17 = arith.subf %10, %12 : vector<32x128xf32>
    %18 = math.exp %17 : vector<32x128xf32>
    %19 = arith.addf %14, %16 : vector<32x128xf32>
    %20 = arith.addf %19, %18 : vector<32x128xf32>
    %21 = tpu.reciprocal %20 : vector<32x128xf32> -> vector<32x128xf32>
    %c0_i32_9 = arith.constant 0 : i32
    %22 = vector.broadcast %c0_i32_9 : i32 to vector<32x128xi32>
    %23 = arith.cmpi sge, %4, %22 : vector<32x128xi32>
    %24 = arith.mulf %14, %21 : vector<32x128xf32>
    %c0_i32_10 = arith.constant 0 : i32
    %25 = vector.broadcast %c0_i32_10 : i32 to vector<32x128xi32>
    %26 = arith.cmpi eq, %4, %25 : vector<32x128xi32>
    %27 = arith.extui %26 : vector<32x128xi1> to vector<32x128xi32>
    %28 = arith.sitofp %27 : vector<32x128xi32> to vector<32x128xf32>
    %cst = arith.constant 0.000000e+00 : f32
    %29 = vector.broadcast %cst : f32 to vector<32x128xf32>
    %30 = arith.select %23, %24, %29 : vector<32x128xi1>, vector<32x128xf32>
    %c0_11 = arith.constant 0 : index
    %c0_12 = arith.constant 0 : index
    %c0_13 = arith.constant 0 : index
    %31 = vector.load %arg4[%c0_11, %c0_12, %c0_13] : memref<3x8x128xf32, #tpu.memory_space<vmem>>, vector<1x8x128xf32>
    %32 = vector.shape_cast %31 : vector<1x8x128xf32> to vector<8x128xf32>
    %33 = arith.mulf %28, %24 : vector<32x128xf32>
    %34 = vector.shape_cast %33 : vector<32x128xf32> to vector<4x8x128xf32>
    %cst_14 = arith.constant dense<0.000000e+00> : vector<8x128xf32>
    %35 = vector.multi_reduction <add>, %34, %cst_14 [0] : vector<4x8x128xf32> to vector<8x128xf32>
    %36 = arith.addf %32, %35 : vector<8x128xf32>
    %c0_15 = arith.constant 0 : index
    %c0_16 = arith.constant 0 : index
    %c0_17 = arith.constant 0 : index
    %37 = vector.load %arg4[%c0_15, %c0_16, %c0_17] : memref<3x8x128xf32, #tpu.memory_space<vmem>>, vector<1x8x128xf32>
    %38 = vector.shape_cast %37 : vector<1x8x128xf32> to vector<8x128xf32>
    %39 = vector.shape_cast %36 : vector<8x128xf32> to vector<1x8x128xf32>
    tpu.vector_store %arg4[%c0_15, %c0_16, %c0_17], %39 {strides = array<i32>} : memref<3x8x128xf32, #tpu.memory_space<vmem>>, vector<1x8x128xf32>,
    %c0_18 = arith.constant 0 : index
    %c0_19 = arith.constant 0 : index
    %c0_20 = arith.constant 0 : index
    %40 = vector.load %arg5[%c0_18, %c0_19, %c0_20] : memref<3x8x128xf32, #tpu.memory_space<vmem>>, vector<1x8x128xf32>
    %41 = vector.shape_cast %40 : vector<1x8x128xf32> to vector<8x128xf32>
    %42 = vector.shape_cast %30 : vector<32x128xf32> to vector<4x8x128xf32>
    %cst_21 = arith.constant dense<0.000000e+00> : vector<8x128xf32>
    %43 = vector.multi_reduction <add>, %42, %cst_21 [0] : vector<4x8x128xf32> to vector<8x128xf32>
    %44 = arith.addf %41, %43 : vector<8x128xf32>
    %c0_22 = arith.constant 0 : index
    %c0_23 = arith.constant 0 : index
    %c0_24 = arith.constant 0 : index
    %45 = vector.load %arg5[%c0_22, %c0_23, %c0_24] : memref<3x8x128xf32, #tpu.memory_space<vmem>>, vector<1x8x128xf32>
    %46 = vector.shape_cast %45 : vector<1x8x128xf32> to vector<8x128xf32>
    %47 = vector.shape_cast %44 : vector<8x128xf32> to vector<1x8x128xf32>
    tpu.vector_store %arg5[%c0_22, %c0_23, %c0_24], %47 {strides = array<i32>} : memref<3x8x128xf32, #tpu.memory_space<vmem>>, vector<1x8x128xf32>,
    %c0_25 = arith.constant 0 : index
    %c0_26 = arith.constant 0 : index
    %c0_27 = arith.constant 0 : index
    %48 = vector.load %arg6[%c0_25, %c0_26, %c0_27] : memref<3x8x128xf32, #tpu.memory_space<vmem>>, vector<1x8x128xf32>
    %49 = vector.shape_cast %48 : vector<1x8x128xf32> to vector<8x128xf32>
    %50 = vector.shape_cast %28 : vector<32x128xf32> to vector<4x8x128xf32>
    %cst_28 = arith.constant dense<0.000000e+00> : vector<8x128xf32>
    %51 = vector.multi_reduction <add>, %50, %cst_28 [0] : vector<4x8x128xf32> to vector<8x128xf32>
    %52 = arith.addf %49, %51 : vector<8x128xf32>
    %c0_29 = arith.constant 0 : index
    %c0_30 = arith.constant 0 : index
    %c0_31 = arith.constant 0 : index
    %53 = vector.load %arg6[%c0_29, %c0_30, %c0_31] : memref<3x8x128xf32, #tpu.memory_space<vmem>>, vector<1x8x128xf32>
    %54 = vector.shape_cast %53 : vector<1x8x128xf32> to vector<8x128xf32>
    %55 = vector.shape_cast %52 : vector<8x128xf32> to vector<1x8x128xf32>
    tpu.vector_store %arg6[%c0_29, %c0_30, %c0_31], %55 {strides = array<i32>} : memref<3x8x128xf32, #tpu.memory_space<vmem>>, vector<1x8x128xf32>,
    %56 = arith.mulf %16, %21 : vector<32x128xf32>
    %c1_i32 = arith.constant 1 : i32
    %57 = vector.broadcast %c1_i32 : i32 to vector<32x128xi32>
    %58 = arith.cmpi eq, %4, %57 : vector<32x128xi32>
    %59 = arith.extui %58 : vector<32x128xi1> to vector<32x128xi32>
    %60 = arith.sitofp %59 : vector<32x128xi32> to vector<32x128xf32>
    %cst_32 = arith.constant 0.000000e+00 : f32
    %61 = vector.broadcast %cst_32 : f32 to vector<32x128xf32>
    %62 = arith.select %23, %56, %61 : vector<32x128xi1>, vector<32x128xf32>
    %c1_33 = arith.constant 1 : index
    %c0_34 = arith.constant 0 : index
    %c0_35 = arith.constant 0 : index
    %63 = vector.load %arg4[%c1_33, %c0_34, %c0_35] : memref<3x8x128xf32, #tpu.memory_space<vmem>>, vector<1x8x128xf32>
    %64 = vector.shape_cast %63 : vector<1x8x128xf32> to vector<8x128xf32>
    %65 = arith.mulf %60, %56 : vector<32x128xf32>
    %66 = vector.shape_cast %65 : vector<32x128xf32> to vector<4x8x128xf32>
    %cst_36 = arith.constant dense<0.000000e+00> : vector<8x128xf32>
    %67 = vector.multi_reduction <add>, %66, %cst_36 [0] : vector<4x8x128xf32> to vector<8x128xf32>
    %68 = arith.addf %64, %67 : vector<8x128xf32>
    %c1_37 = arith.constant 1 : index
    %c0_38 = arith.constant 0 : index
    %c0_39 = arith.constant 0 : index
    %69 = vector.load %arg4[%c1_37, %c0_38, %c0_39] : memref<3x8x128xf32, #tpu.memory_space<vmem>>, vector<1x8x128xf32>
    %70 = vector.shape_cast %69 : vector<1x8x128xf32> to vector<8x128xf32>
    %71 = vector.shape_cast %68 : vector<8x128xf32> to vector<1x8x128xf32>
    tpu.vector_store %arg4[%c1_37, %c0_38, %c0_39], %71 {strides = array<i32>} : memref<3x8x128xf32, #tpu.memory_space<vmem>>, vector<1x8x128xf32>,
    %c1_40 = arith.constant 1 : index
    %c0_41 = arith.constant 0 : index
    %c0_42 = arith.constant 0 : index
    %72 = vector.load %arg5[%c1_40, %c0_41, %c0_42] : memref<3x8x128xf32, #tpu.memory_space<vmem>>, vector<1x8x128xf32>
    %73 = vector.shape_cast %72 : vector<1x8x128xf32> to vector<8x128xf32>
    %74 = vector.shape_cast %62 : vector<32x128xf32> to vector<4x8x128xf32>
    %cst_43 = arith.constant dense<0.000000e+00> : vector<8x128xf32>
    %75 = vector.multi_reduction <add>, %74, %cst_43 [0] : vector<4x8x128xf32> to vector<8x128xf32>
    %76 = arith.addf %73, %75 : vector<8x128xf32>
    %c1_44 = arith.constant 1 : index
    %c0_45 = arith.constant 0 : index
    %c0_46 = arith.constant 0 : index
    %77 = vector.load %arg5[%c1_44, %c0_45, %c0_46] : memref<3x8x128xf32, #tpu.memory_space<vmem>>, vector<1x8x128xf32>
    %78 = vector.shape_cast %77 : vector<1x8x128xf32> to vector<8x128xf32>
    %79 = vector.shape_cast %76 : vector<8x128xf32> to vector<1x8x128xf32>
    tpu.vector_store %arg5[%c1_44, %c0_45, %c0_46], %79 {strides = array<i32>} : memref<3x8x128xf32, #tpu.memory_space<vmem>>, vector<1x8x128xf32>,
    %c1_47 = arith.constant 1 : index
    %c0_48 = arith.constant 0 : index
    %c0_49 = arith.constant 0 : index
    %80 = vector.load %arg6[%c1_47, %c0_48, %c0_49] : memref<3x8x128xf32, #tpu.memory_space<vmem>>, vector<1x8x128xf32>
    %81 = vector.shape_cast %80 : vector<1x8x128xf32> to vector<8x128xf32>
    %82 = vector.shape_cast %60 : vector<32x128xf32> to vector<4x8x128xf32>
    %cst_50 = arith.constant dense<0.000000e+00> : vector<8x128xf32>
    %83 = vector.multi_reduction <add>, %82, %cst_50 [0] : vector<4x8x128xf32> to vector<8x128xf32>
    %84 = arith.addf %81, %83 : vector<8x128xf32>
    %c1_51 = arith.constant 1 : index
    %c0_52 = arith.constant 0 : index
    %c0_53 = arith.constant 0 : index
    %85 = vector.load %arg6[%c1_51, %c0_52, %c0_53] : memref<3x8x128xf32, #tpu.memory_space<vmem>>, vector<1x8x128xf32>
    %86 = vector.shape_cast %85 : vector<1x8x128xf32> to vector<8x128xf32>
    %87 = vector.shape_cast %84 : vector<8x128xf32> to vector<1x8x128xf32>
    tpu.vector_store %arg6[%c1_51, %c0_52, %c0_53], %87 {strides = array<i32>} : memref<3x8x128xf32, #tpu.memory_space<vmem>>, vector<1x8x128xf32>,
    %88 = arith.mulf %18, %21 : vector<32x128xf32>
    %c2_i32 = arith.constant 2 : i32
    %89 = vector.broadcast %c2_i32 : i32 to vector<32x128xi32>
    %90 = arith.cmpi eq, %4, %89 : vector<32x128xi32>
    %91 = arith.extui %90 : vector<32x128xi1> to vector<32x128xi32>
    %92 = arith.sitofp %91 : vector<32x128xi32> to vector<32x128xf32>
    %cst_54 = arith.constant 0.000000e+00 : f32
    %93 = vector.broadcast %cst_54 : f32 to vector<32x128xf32>
    %94 = arith.select %23, %88, %93 : vector<32x128xi1>, vector<32x128xf32>
    %c2_55 = arith.constant 2 : index
    %c0_56 = arith.constant 0 : index
    %c0_57 = arith.constant 0 : index
    %95 = vector.load %arg4[%c2_55, %c0_56, %c0_57] : memref<3x8x128xf32, #tpu.memory_space<vmem>>, vector<1x8x128xf32>
    %96 = vector.shape_cast %95 : vector<1x8x128xf32> to vector<8x128xf32>
    %97 = arith.mulf %92, %88 : vector<32x128xf32>
    %98 = vector.shape_cast %97 : vector<32x128xf32> to vector<4x8x128xf32>
    %cst_58 = arith.constant dense<0.000000e+00> : vector<8x128xf32>
    %99 = vector.multi_reduction <add>, %98, %cst_58 [0] : vector<4x8x128xf32> to vector<8x128xf32>
    %100 = arith.addf %96, %99 : vector<8x128xf32>
    %c2_59 = arith.constant 2 : index
    %c0_60 = arith.constant 0 : index
    %c0_61 = arith.constant 0 : index
    %101 = vector.load %arg4[%c2_59, %c0_60, %c0_61] : memref<3x8x128xf32, #tpu.memory_space<vmem>>, vector<1x8x128xf32>
    %102 = vector.shape_cast %101 : vector<1x8x128xf32> to vector<8x128xf32>
    %103 = vector.shape_cast %100 : vector<8x128xf32> to vector<1x8x128xf32>
    tpu.vector_store %arg4[%c2_59, %c0_60, %c0_61], %103 {strides = array<i32>} : memref<3x8x128xf32, #tpu.memory_space<vmem>>, vector<1x8x128xf32>,
    %c2_62 = arith.constant 2 : index
    %c0_63 = arith.constant 0 : index
    %c0_64 = arith.constant 0 : index
    %104 = vector.load %arg5[%c2_62, %c0_63, %c0_64] : memref<3x8x128xf32, #tpu.memory_space<vmem>>, vector<1x8x128xf32>
    %105 = vector.shape_cast %104 : vector<1x8x128xf32> to vector<8x128xf32>
    %106 = vector.shape_cast %94 : vector<32x128xf32> to vector<4x8x128xf32>
    %cst_65 = arith.constant dense<0.000000e+00> : vector<8x128xf32>
    %107 = vector.multi_reduction <add>, %106, %cst_65 [0] : vector<4x8x128xf32> to vector<8x128xf32>
    %108 = arith.addf %105, %107 : vector<8x128xf32>
    %c2_66 = arith.constant 2 : index
    %c0_67 = arith.constant 0 : index
    %c0_68 = arith.constant 0 : index
    %109 = vector.load %arg5[%c2_66, %c0_67, %c0_68] : memref<3x8x128xf32, #tpu.memory_space<vmem>>, vector<1x8x128xf32>
    %110 = vector.shape_cast %109 : vector<1x8x128xf32> to vector<8x128xf32>
    %111 = vector.shape_cast %108 : vector<8x128xf32> to vector<1x8x128xf32>
    tpu.vector_store %arg5[%c2_66, %c0_67, %c0_68], %111 {strides = array<i32>} : memref<3x8x128xf32, #tpu.memory_space<vmem>>, vector<1x8x128xf32>,
    %c2_69 = arith.constant 2 : index
    %c0_70 = arith.constant 0 : index
    %c0_71 = arith.constant 0 : index
    %112 = vector.load %arg6[%c2_69, %c0_70, %c0_71] : memref<3x8x128xf32, #tpu.memory_space<vmem>>, vector<1x8x128xf32>
    %113 = vector.shape_cast %112 : vector<1x8x128xf32> to vector<8x128xf32>
    %114 = vector.shape_cast %92 : vector<32x128xf32> to vector<4x8x128xf32>
    %cst_72 = arith.constant dense<0.000000e+00> : vector<8x128xf32>
    %115 = vector.multi_reduction <add>, %114, %cst_72 [0] : vector<4x8x128xf32> to vector<8x128xf32>
    %116 = arith.addf %113, %115 : vector<8x128xf32>
    %c2_73 = arith.constant 2 : index
    %c0_74 = arith.constant 0 : index
    %c0_75 = arith.constant 0 : index
    %117 = vector.load %arg6[%c2_73, %c0_74, %c0_75] : memref<3x8x128xf32, #tpu.memory_space<vmem>>, vector<1x8x128xf32>
    %118 = vector.shape_cast %117 : vector<1x8x128xf32> to vector<8x128xf32>
    %119 = vector.shape_cast %116 : vector<8x128xf32> to vector<1x8x128xf32>
    tpu.vector_store %arg6[%c2_73, %c0_74, %c0_75], %119 {strides = array<i32>} : memref<3x8x128xf32, #tpu.memory_space<vmem>>, vector<1x8x128xf32>,
    %c0_i32_76 = arith.constant 0 : i32
    %120 = arith.cmpi eq, %arg0, %c0_i32_76 : i32
    %121 = arith.extui %120 : i1 to i32
    %c0_i32_77 = arith.constant 0 : i32
    %122 = arith.cmpi ne, %121, %c0_i32_77 : i32
    scf.if %122 {
      %c0_78 = arith.constant 0 : index
      %c0_79 = arith.constant 0 : index
      %c0_80 = arith.constant 0 : index
      %123 = vector.load %arg4[%c0_78, %c0_79, %c0_80] : memref<3x8x128xf32, #tpu.memory_space<vmem>>, vector<3x8x128xf32>
      %cst_81 = arith.constant dense<0.000000e+00> : vector<3x8xf32>
      %124 = vector.multi_reduction <add>, %123, %cst_81 [2] : vector<3x8x128xf32> to vector<3x8xf32>
      %cst_82 = arith.constant dense<0.000000e+00> : vector<3xf32>
      %125 = vector.multi_reduction <add>, %124, %cst_82 [1] : vector<3x8xf32> to vector<3xf32>
      %126 = vector.shape_cast %125 : vector<3xf32> to vector<3x1xf32>
      %c0_83 = arith.constant 0 : index
      %c0_84 = arith.constant 0 : index
      %c0_85 = arith.constant 0 : index
      %127 = vector.load %arg5[%c0_83, %c0_84, %c0_85] : memref<3x8x128xf32, #tpu.memory_space<vmem>>, vector<3x8x128xf32>
      %cst_86 = arith.constant dense<0.000000e+00> : vector<3x8xf32>
      %128 = vector.multi_reduction <add>, %127, %cst_86 [2] : vector<3x8x128xf32> to vector<3x8xf32>
      %cst_87 = arith.constant dense<0.000000e+00> : vector<3xf32>
      %129 = vector.multi_reduction <add>, %128, %cst_87 [1] : vector<3x8xf32> to vector<3xf32>
      %130 = vector.shape_cast %129 : vector<3xf32> to vector<3x1xf32>
      %c0_88 = arith.constant 0 : index
      %c0_89 = arith.constant 0 : index
      %c0_90 = arith.constant 0 : index
      %131 = vector.load %arg6[%c0_88, %c0_89, %c0_90] : memref<3x8x128xf32, #tpu.memory_space<vmem>>, vector<3x8x128xf32>
      %cst_91 = arith.constant dense<0.000000e+00> : vector<3x8xf32>
      %132 = vector.multi_reduction <add>, %131, %cst_91 [2] : vector<3x8x128xf32> to vector<3x8xf32>
      %cst_92 = arith.constant dense<0.000000e+00> : vector<3xf32>
      %133 = vector.multi_reduction <add>, %132, %cst_92 [1] : vector<3x8xf32> to vector<3xf32>
      %134 = vector.shape_cast %133 : vector<3xf32> to vector<3x1xf32>
      %cst_93 = arith.constant 1.000000e-07 : f32
      %135 = vector.broadcast %cst_93 : f32 to vector<3x1xf32>
      %136 = arith.addf %130, %135 : vector<3x1xf32>
      %137 = arith.divf %126, %136 : vector<3x1xf32>
      %cst_94 = arith.constant 1.000000e-07 : f32
      %138 = vector.broadcast %cst_94 : f32 to vector<3x1xf32>
      %139 = arith.addf %134, %138 : vector<3x1xf32>
      %140 = arith.divf %126, %139 : vector<3x1xf32>
      %cst_95 = arith.constant 2.000000e+00 : f32
      %141 = vector.broadcast %cst_95 : f32 to vector<3x1xf32>
      %142 = arith.mulf %141, %137 : vector<3x1xf32>
      %143 = arith.mulf %142, %140 : vector<3x1xf32>
      %144 = arith.addf %137, %140 : vector<3x1xf32>
      %cst_96 = arith.constant 1.000000e-07 : f32
      %145 = vector.broadcast %cst_96 : f32 to vector<3x1xf32>
      %146 = arith.addf %144, %145 : vector<3x1xf32>
      %147 = arith.divf %143, %146 : vector<3x1xf32>
      %cst_97 = arith.constant 1.000000e-07 : f32
      %cst_98 = arith.constant 0.99999988 : f32
      %148 = vector.broadcast %cst_97 : f32 to vector<3x1xf32>
      %149 = arith.maximumf %148, %147 : vector<3x1xf32>
      %150 = vector.broadcast %cst_98 : f32 to vector<3x1xf32>
      %151 = arith.minimumf %150, %149 : vector<3x1xf32>
      %152 = vector.shape_cast %151 : vector<3x1xf32> to vector<1x3x1xf32>
      %cst_99 = arith.constant dense<0.000000e+00> : vector<1xf32>
      %153 = vector.multi_reduction <add>, %152, %cst_99 [1, 2] : vector<1x3x1xf32> to vector<1xf32>
      %154 = vector.shape_cast %153 : vector<1xf32> to vector<1x1x1xf32>
      %155 = vector.extract %154[0, 0, 0] : f32 from vector<1x1x1xf32>
      %cst_100 = arith.constant 3.000000e+00 : f32
      %156 = arith.divf %155, %cst_100 : f32
      %cst_101 = arith.constant 1.000000e+00 : f32
      %157 = arith.subf %cst_101, %156 : f32
      %158 = vector.broadcast %157 : f32 to vector<1x1xf32>
      %c0_102 = arith.constant 0 : index
      %c0_103 = arith.constant 0 : index
      %159 = vector.load %arg3[%c0_102, %c0_103] : memref<1x1xf32, #tpu.memory_space<vmem>>, vector<1x1xf32>
      tpu.vector_store %arg3[%c0_102, %c0_103], %158 {strides = array<i32>} : memref<1x1xf32, #tpu.memory_space<vmem>>, vector<1x1xf32>,
    } else {
    }
    return
  }
  func.func @transform_0(%arg0: i32) -> (i32, i32, i32) {
    %c0_i32 = arith.constant 0 : i32
    %c0_i32_0 = arith.constant 0 : i32
    %c0_i32_1 = arith.constant 0 : i32
    return %c0_i32, %arg0, %c0_i32_0 : i32, i32, i32
  }
  func.func @transform_1(%arg0: i32) -> (i32, i32) {
    %c0_i32 = arith.constant 0 : i32
    %c0_i32_0 = arith.constant 0 : i32
    return %arg0, %c0_i32 : i32, i32
  }
  func.func @transform_2(%arg0: i32) -> (i32, i32) {
    %c0_i32 = arith.constant 0 : i32
    %c0_i32_0 = arith.constant 0 : i32
    %c0_i32_1 = arith.constant 0 : i32
    return %c0_i32, %c0_i32_0 : i32, i32
  }
}

</mosaic_0001>

<llo_original>
// kernel: tpu_custom_call.1
$region0: #{tpu_custom_call.1}
  #allocation0 [shape = 'u32[]', space=smem, size = 0x4, offset = 0x4, fixed_abs, tag = 'smem constant byte address 0x4 - core index']
  #allocation1 [shape = 'u32[144,128]{1,0:T(1,128)}', space=vmem, size = 0x12000, scoped, tag = 'internal scratch']
  #allocation2 [shape = 'f32[3,8,128]{2,1,0:T(8,128)}', space=vmem, size = 0x3000, scoped, tag = 'scratch operand']
  #allocation3 [shape = 'f32[3,8,128]{2,1,0:T(8,128)}', space=vmem, size = 0x3000, scoped, tag = 'scratch operand']
  #allocation4 [shape = 'f32[3,8,128]{2,1,0:T(8,128)}', space=vmem, size = 0x3000, scoped, tag = 'scratch operand']
  %s0 = inlined_call_operand.hbm [shape: f32[3,32,128], index: 0, kind: input, shape index: {}]
  %s1 = inlined_call_operand.hbm [shape: s8[32,128], index: 1, kind: input, shape index: {}]
  %s2 = inlined_call_operand.hbm [shape: f32[1,1], index: 2, kind: output, shape index: {}]
  %s3 = sld [smem:[#allocation0]]
  $region34: #{tpu_custom_call.1} parent=0
    _
  %s5 = ssub.s32 1, %s3
  %s6 = scalar_select 0, %s5, %s3
  $region1: #{tpu_custom_call.1} parent=0
    #allocation5 [shape = 'u8[49152]{0}', space=vmem, size = 0xc000, scoped, tag = 'input window, operand 0, single buffered']
    #allocation6 [shape = 's32[1]{0}', space=sflag, size = 0x4, scoped, tag = 'scoped memory for tpu_custom_call.1']
    #allocation7 [shape = 's32[1]{0}', space=sflag, size = 0x4, scoped, tag = 'scoped memory for tpu_custom_call.1']
    #allocation8 [shape = 'u8[4096]{0}', space=vmem, size = 0x1000, scoped, tag = 'input window, operand 1, single buffered']
    #allocation9 [shape = 's32[1]{0}', space=sflag, size = 0x4, scoped, tag = 'scoped memory for tpu_custom_call.1']
    #allocation10 [shape = 'u8[512]{0}', space=vmem, size = 0x400, scoped, tag = 'output window, operand 0, single buffered']
    %7 = vsyncpa [#allocation6], 0
    %8 = vsyncpa [#allocation9], 0
    %9 = vsyncpa [#allocation7], 0
    // Predicated region
    $region2: #{tpu_custom_call.1} parent=1 // pred_check
      _
    $region3: #{tpu_custom_call.1} parent=1 // pred_check_branch
      %11 = sbr.rel (0) target = $region5
    $region4: #{tpu_custom_call.1} parent=1 // pred_region
      %s13 = ssub.s32 1536, 1536
      %14 = vsyncadd [#allocation6], %s13
      %s15 = sshll.u32 [#allocation5], 4
      %s16 = int_to_ptr.vmem [resolvable:$true] %s15
      %21 = dma.hbm_to_vmem [thread:$0]  %s0, 1536, %s16, [#allocation6], 128, 128, 8
    $region5: #{tpu_custom_call.1} parent=1 // pred_fallthru
      _
    // Predicated region
    $region6: #{tpu_custom_call.1} parent=1 // pred_check
      _
    $region7: #{tpu_custom_call.1} parent=1 // pred_check_branch
      %23 = sbr.rel (0) target = $region9
    $region8: #{tpu_custom_call.1} parent=1 // pred_region
      %s25 = ssub.s32 128, 128
      %26 = vsyncadd [#allocation9], %s25
      %s28 = sshll.u32 [#allocation8], 4
      %s29 = int_to_ptr.vmem [resolvable:$true] %s28
      %31 = dma.hbm_to_vmem [thread:$0]  %s1, 128, %s29, [#allocation9]
    $region9: #{tpu_custom_call.1} parent=1 // pred_fallthru
      _
    // Predicated region
    $region10: #{tpu_custom_call.1} parent=1 // pred_check
      _
    $region11: #{tpu_custom_call.1} parent=1 // pred_check_branch
      %33 = sbr.rel (0) target = $region13
    $region12: #{tpu_custom_call.1} parent=1 // pred_region
      %34 = dma.done [#allocation6], 1536
    $region13: #{tpu_custom_call.1} parent=1 // pred_fallthru
      _
    // Predicated region
    $region14: #{tpu_custom_call.1} parent=1 // pred_check
      _
    $region15: #{tpu_custom_call.1} parent=1 // pred_check_branch
      %36 = sbr.rel (0) target = $region17
    $region16: #{tpu_custom_call.1} parent=1 // pred_region
      %37 = dma.done [#allocation9], 128
    $region17: #{tpu_custom_call.1} parent=1 // pred_fallthru
      _
    %p38 = scmp.eq.s32.totalorder 0, 0
    // Predicated region
    $region18: #{tpu_custom_call.1} parent=1 // pred_check
      %p39 = pneg %p38
    $region19: #{tpu_custom_call.1} parent=1 // pred_check_branch
      %41 = sbr.rel (%p39) target = $region21
    $region20: #{tpu_custom_call.1} parent=1 // pred_region
      %42 = vst [vmem:[#allocation2] sm:$0xff] 0.0
      %43 = vst [vmem:[#allocation2 + $0x8] sm:$0xff] 0.0
      %44 = vst [vmem:[#allocation2 + $0x10] sm:$0xff] 0.0
      %45 = vst [vmem:[#allocation3] sm:$0xff] 0.0
      %46 = vst [vmem:[#allocation3 + $0x8] sm:$0xff] 0.0
      %47 = vst [vmem:[#allocation3 + $0x10] sm:$0xff] 0.0
      %48 = vst [vmem:[#allocation4] sm:$0xff] 0.0
      %49 = vst [vmem:[#allocation4 + $0x8] sm:$0xff] 0.0
      %50 = vst [vmem:[#allocation4 + $0x10] sm:$0xff] 0.0
    $region21: #{tpu_custom_call.1} parent=1 // pred_fallthru
      _
    %v51 = vld [vmem:[#allocation8] sm:$0xff]
    %v52 = vunpack.c.0.s8 %v51
    %v53 = vunpack.c.1.s8 %v51
    %v54 = vunpack.c.2.s8 %v51
    %v55 = vunpack.c.3.s8 %v51
    %v56 = vld [vmem:[#allocation5] sm:$0xff]
    %v57 = vld [vmem:[#allocation5 + $0x8] sm:$0xff]
    %v58 = vld [vmem:[#allocation5 + $0x10] sm:$0xff]
    %v59 = vld [vmem:[#allocation5 + $0x18] sm:$0xff]
    %s60 = scalar_lea.vmem [#allocation5], 32
    %v61 = vld [vmem:[%s60] sm:$0xff]
    %v62 = vld [vmem:[%s60 + $0x8] sm:$0xff]
    %v63 = vld [vmem:[%s60 + $0x10] sm:$0xff]
    %v64 = vld [vmem:[%s60 + $0x18] sm:$0xff]
    %s65 = scalar_lea.vmem [#allocation5], 64
    %v66 = vld [vmem:[%s65] sm:$0xff]
    %v67 = vld [vmem:[%s65 + $0x8] sm:$0xff]
    %v68 = vld [vmem:[%s65 + $0x10] sm:$0xff]
    %v69 = vld [vmem:[%s65 + $0x18] sm:$0xff]
    %v70 = vmax.f32 %v56, %v61
    %v71 = vmax.f32 %v57, %v62
    %v72 = vmax.f32 %v58, %v63
    %v73 = vmax.f32 %v59, %v64
    %v74 = vmax.f32 %v70, %v66
    %v75 = vmax.f32 %v71, %v67
    %v76 = vmax.f32 %v72, %v68
    %v77 = vmax.f32 %v73, %v69
    %v78 = vsub.f32 %v56, %v74
    %v79 = vsub.f32 %v57, %v75
    %v80 = vsub.f32 %v58, %v76
    %v81 = vsub.f32 %v59, %v77
    %v82 = vmul.f32 %v78, 1.442695
    %v83 = vpow.pop %v82
    %v84 = vmul.f32 %v79, 1.442695
    %v85 = vpow.pop %v84
    %v86 = vmul.f32 %v80, 1.442695
    %v87 = vpow.pop %v86
    %v88 = vmul.f32 %v81, 1.442695
    %v89 = vpow.pop %v88
    %v90 = vsub.f32 %v61, %v74
    %v91 = vsub.f32 %v62, %v75
    %v92 = vsub.f32 %v63, %v76
    %v93 = vsub.f32 %v64, %v77
    %v94 = vmul.f32 %v90, 1.442695
    %v95 = vpow.pop %v94
    %v96 = vmul.f32 %v91, 1.442695
    %v97 = vpow.pop %v96
    %v98 = vmul.f32 %v92, 1.442695
    %v99 = vpow.pop %v98
    %v100 = vmul.f32 %v93, 1.442695
    %v101 = vpow.pop %v100
    %v102 = vsub.f32 %v66, %v74
    %v103 = vsub.f32 %v67, %v75
    %v104 = vsub.f32 %v68, %v76
    %v105 = vsub.f32 %v69, %v77
    %v106 = vmul.f32 %v102, 1.442695
    %v107 = vpow.pop %v106
    %v108 = vmul.f32 %v103, 1.442695
    %v109 = vpow.pop %v108
    %v110 = vmul.f32 %v104, 1.442695
    %v111 = vpow.pop %v110
    %v112 = vmul.f32 %v105, 1.442695
    %v113 = vpow.pop %v112
    %v114 = vadd.f32 %v83, %v95
    %v115 = vadd.f32 %v85, %v97
    %v116 = vadd.f32 %v87, %v99
    %v117 = vadd.f32 %v89, %v101
    %v118 = vadd.f32 %v114, %v107
    %v119 = vadd.f32 %v115, %v109
    %v120 = vadd.f32 %v116, %v111
    %v121 = vadd.f32 %v117, %v113
    %v122 = vrcp.pop %v118
    %v123 = vrcp.pop %v119
    %v124 = vrcp.pop %v120
    %v125 = vrcp.pop %v121
    %vm126 = vcmp.ge.s32.totalorder %v52, 0
    %vm127 = vcmp.ge.s32.totalorder %v53, 0
    %vm128 = vcmp.ge.s32.totalorder %v54, 0
    %vm129 = vcmp.ge.s32.totalorder %v55, 0
    %v130 = vmul.f32 %v83, %v122
    %v131 = vmul.f32 %v85, %v123
    %v132 = vmul.f32 %v87, %v124
    %v133 = vmul.f32 %v89, %v125
    %vm134 = vcmp.eq.s32.totalorder %v52, 0
    %vm135 = vcmp.eq.s32.totalorder %v53, 0
    %vm136 = vcmp.eq.s32.totalorder %v54, 0
    %vm137 = vcmp.eq.s32.totalorder %v55, 0
    %v138 = vsel %vm134, 1, 0
    %v139 = vsel %vm135, 1, 0
    %v140 = vsel %vm136, 1, 0
    %v141 = vsel %vm137, 1, 0
    %v142 = vcvt.s32.f32 %v138
    %v143 = vcvt.s32.f32 %v139
    %v144 = vcvt.s32.f32 %v140
    %v145 = vcvt.s32.f32 %v141
    %v146 = vsel %vm126, %v130, 0.0
    %v147 = vsel %vm127, %v131, 0.0
    %v148 = vsel %vm128, %v132, 0.0
    %v149 = vsel %vm129, %v133, 0.0
    %v150 = vld [vmem:[#allocation2] sm:$0xff]
    %v151 = vmul.f32 %v142, %v130
    %v152 = vmul.f32 %v143, %v131
    %v153 = vmul.f32 %v144, %v132
    %v154 = vmul.f32 %v145, %v133
    %v155 = vadd.f32 %v151, %v152
    %v156 = vadd.f32 %v155, %v153
    %v157 = vadd.f32 %v156, %v154
    %v158 = vadd.f32 %v150, %v157
    %159 = vst [vmem:[#allocation2] sm:$0xff] %v158
    %v160 = vld [vmem:[#allocation3] sm:$0xff]
    %v161 = vadd.f32 %v146, %v147
    %v162 = vadd.f32 %v161, %v148
    %v163 = vadd.f32 %v162, %v149
    %v164 = vadd.f32 %v160, %v163
    %165 = vst [vmem:[#allocation3] sm:$0xff] %v164
    %v166 = vld [vmem:[#allocation4] sm:$0xff]
    %v167 = vadd.f32 %v142, %v143
    %v168 = vadd.f32 %v167, %v144
    %v169 = vadd.f32 %v168, %v145
    %v170 = vadd.f32 %v166, %v169
    %171 = vst [vmem:[#allocation4] sm:$0xff] %v170
    %v172 = vmul.f32 %v95, %v122
    %v173 = vmul.f32 %v97, %v123
    %v174 = vmul.f32 %v99, %v124
    %v175 = vmul.f32 %v101, %v125
    %vm176 = vcmp.eq.s32.totalorder %v52, 1
    %vm177 = vcmp.eq.s32.totalorder %v53, 1
    %vm178 = vcmp.eq.s32.totalorder %v54, 1
    %vm179 = vcmp.eq.s32.totalorder %v55, 1
    %v180 = vsel %vm176, 1, 0
    %v181 = vsel %vm177, 1, 0
    %v182 = vsel %vm178, 1, 0
    %v183 = vsel %vm179, 1, 0
    %v184 = vcvt.s32.f32 %v180
    %v185 = vcvt.s32.f32 %v181
    %v186 = vcvt.s32.f32 %v182
    %v187 = vcvt.s32.f32 %v183
    %v188 = vsel %vm126, %v172, 0.0
    %v189 = vsel %vm127, %v173, 0.0
    %v190 = vsel %vm128, %v174, 0.0
    %v191 = vsel %vm129, %v175, 0.0
    %s192 = scalar_lea.vmem [#allocation2], 8
    %v193 = vld [vmem:[%s192] sm:$0xff]
    %v194 = vmul.f32 %v184, %v172
    %v195 = vmul.f32 %v185, %v173
    %v196 = vmul.f32 %v186, %v174
    %v197 = vmul.f32 %v187, %v175
    %v198 = vadd.f32 %v194, %v195
    %v199 = vadd.f32 %v198, %v196
    %v200 = vadd.f32 %v199, %v197
    %v201 = vadd.f32 %v193, %v200
    %202 = vst [vmem:[%s192] sm:$0xff] %v201
    %s203 = scalar_lea.vmem [#allocation3], 8
    %v204 = vld [vmem:[%s203] sm:$0xff]
    %v205 = vadd.f32 %v188, %v189
    %v206 = vadd.f32 %v205, %v190
    %v207 = vadd.f32 %v206, %v191
    %v208 = vadd.f32 %v204, %v207
    %209 = vst [vmem:[%s203] sm:$0xff] %v208
    %s210 = scalar_lea.vmem [#allocation4], 8
    %v211 = vld [vmem:[%s210] sm:$0xff]
    %v212 = vadd.f32 %v184, %v185
    %v213 = vadd.f32 %v212, %v186
    %v214 = vadd.f32 %v213, %v187
    %v215 = vadd.f32 %v211, %v214
    %216 = vst [vmem:[%s210] sm:$0xff] %v215
    %v217 = vmul.f32 %v107, %v122
    %v218 = vmul.f32 %v109, %v123
    %v219 = vmul.f32 %v111, %v124
    %v220 = vmul.f32 %v113, %v125
    %vm221 = vcmp.eq.s32.totalorder %v52, 2
    %vm222 = vcmp.eq.s32.totalorder %v53, 2
    %vm223 = vcmp.eq.s32.totalorder %v54, 2
    %vm224 = vcmp.eq.s32.totalorder %v55, 2
    %v225 = vsel %vm221, 1, 0
    %v226 = vsel %vm222, 1, 0
    %v227 = vsel %vm223, 1, 0
    %v228 = vsel %vm224, 1, 0
    %v229 = vcvt.s32.f32 %v225
    %v230 = vcvt.s32.f32 %v226
    %v231 = vcvt.s32.f32 %v227
    %v232 = vcvt.s32.f32 %v228
    %v233 = vsel %vm126, %v217, 0.0
    %v234 = vsel %vm127, %v218, 0.0
    %v235 = vsel %vm128, %v219, 0.0
    %v236 = vsel %vm129, %v220, 0.0
    %s237 = scalar_lea.vmem [#allocation2], 16
    %v238 = vld [vmem:[%s237] sm:$0xff]
    %v239 = vmul.f32 %v229, %v217
    %v240 = vmul.f32 %v230, %v218
    %v241 = vmul.f32 %v231, %v219
    %v242 = vmul.f32 %v232, %v220
    %v243 = vadd.f32 %v239, %v240
    %v244 = vadd.f32 %v243, %v241
    %v245 = vadd.f32 %v244, %v242
    %v246 = vadd.f32 %v238, %v245
    %247 = vst [vmem:[%s237] sm:$0xff] %v246
    %s248 = scalar_lea.vmem [#allocation3], 16
    %v249 = vld [vmem:[%s248] sm:$0xff]
    %v250 = vadd.f32 %v233, %v234
    %v251 = vadd.f32 %v250, %v235
    %v252 = vadd.f32 %v251, %v236
    %v253 = vadd.f32 %v249, %v252
    %254 = vst [vmem:[%s248] sm:$0xff] %v253
    %s255 = scalar_lea.vmem [#allocation4], 16
    %v256 = vld [vmem:[%s255] sm:$0xff]
    %v257 = vadd.f32 %v229, %v230
    %v258 = vadd.f32 %v257, %v231
    %v259 = vadd.f32 %v258, %v232
    %v260 = vadd.f32 %v256, %v259
    %261 = vst [vmem:[%s255] sm:$0xff] %v260
    // Predicated region
    $region22: #{tpu_custom_call.1} parent=1 // pred_check
      %p262 = pneg %p38
    $region23: #{tpu_custom_call.1} parent=1 // pred_check_branch
      %264 = sbr.rel (%p262) target = $region25
    $region24: #{tpu_custom_call.1} parent=1 // pred_region
      %v265 = vld [vmem:[#allocation2] sm:$0xff]
      %v266 = vld [vmem:[#allocation2 + $0x8] sm:$0xff]
      %v267 = vld [vmem:[#allocation2 + $0x10] sm:$0xff]
      %268 = vadd.xlane.f32.xlu0 %v265
      %v269 = vpop.xlane.xlu0 %268
      %270 = vadd.xlane.f32.xlu0 %v266
      %v271 = vpop.xlane.xlu0 %270
      %272 = vadd.xlane.f32.xlu0 %v267
      %v273 = vpop.xlane.xlu0 %272
      %v277 = vlaneseq
      %v278 = vand.u32 %v277, 127
      %v279 = vlaneseq
      %v280 = vshrl.u32 %v279, 7
      %v281 = vsub.s32 %v278, %v280
      %v282 = vrot.slane %v269, %v281
      %v283 = vlaneseq
      %v284 = vshrl.u32 %v283, 7
      %v285 = vsub.s32 %v278, %v284
      %v286 = vrot.slane %v271, %v285
      %v287 = vlaneseq
      %v288 = vshrl.u32 %v287, 7
      %v289 = vsub.s32 %v278, %v288
      %v290 = vrot.slane %v273, %v289
      %vm291 = vcmask 1041409
      %v292 = vsel %vm291, %v286, %v282
      %vm293 = vcmask 1042434
      %v294 = vsel %vm293, %v290, %v292
      %vm296 = vcmask 59392
      %v297 = vsel %vm296, %v294, 0.0
      %298 = vadd.xlane.f32.xlu0 %v297
      %v299 = vpop.xlane.xlu0 %298
      %v300 = vld [vmem:[#allocation3] sm:$0xff]
      %v301 = vld [vmem:[#allocation3 + $0x8] sm:$0xff]
      %v302 = vld [vmem:[#allocation3 + $0x10] sm:$0xff]
      %303 = vadd.xlane.f32.xlu0 %v300
      %v304 = vpop.xlane.xlu0 %303
      %305 = vadd.xlane.f32.xlu0 %v301
      %v306 = vpop.xlane.xlu0 %305
      %307 = vadd.xlane.f32.xlu0 %v302
      %v308 = vpop.xlane.xlu0 %307
      %v312 = vlaneseq
      %v313 = vshrl.u32 %v312, 7
      %v314 = vsub.s32 %v278, %v313
      %v315 = vrot.slane %v304, %v314
      %v316 = vlaneseq
      %v317 = vshrl.u32 %v316, 7
      %v318 = vsub.s32 %v278, %v317
      %v319 = vrot.slane %v306, %v318
      %v320 = vlaneseq
      %v321 = vshrl.u32 %v320, 7
      %v322 = vsub.s32 %v278, %v321
      %v323 = vrot.slane %v308, %v322
      %v324 = vsel %vm291, %v319, %v315
      %v325 = vsel %vm293, %v323, %v324
      %v327 = vsel %vm296, %v325, 0.0
      %328 = vadd.xlane.f32.xlu0 %v327
      %v329 = vpop.xlane.xlu0 %328
      %v330 = vld [vmem:[#allocation4] sm:$0xff]
      %v331 = vld [vmem:[#allocation4 + $0x8] sm:$0xff]
      %v332 = vld [vmem:[#allocation4 + $0x10] sm:$0xff]
      %333 = vadd.xlane.f32.xlu0 %v330
      %v334 = vpop.xlane.xlu0 %333
      %335 = vadd.xlane.f32.xlu0 %v331
      %v336 = vpop.xlane.xlu0 %335
      %337 = vadd.xlane.f32.xlu0 %v332
      %v338 = vpop.xlane.xlu0 %337
      %v342 = vlaneseq
      %v343 = vshrl.u32 %v342, 7
      %v344 = vsub.s32 %v278, %v343
      %v345 = vrot.slane %v334, %v344
      %v346 = vlaneseq
      %v347 = vshrl.u32 %v346, 7
      %v348 = vsub.s32 %v278, %v347
      %v349 = vrot.slane %v336, %v348
      %v350 = vlaneseq
      %v351 = vshrl.u32 %v350, 7
      %v352 = vsub.s32 %v278, %v351
      %v353 = vrot.slane %v338, %v352
      %v354 = vsel %vm291, %v349, %v345
      %v355 = vsel %vm293, %v353, %v354
      %v357 = vsel %vm296, %v355, 0.0
      %358 = vadd.xlane.f32.xlu0 %v357
      %v359 = vpop.xlane.xlu0 %358
      %v360 = vadd.f32 %v329, 1e-07
      %v361 = vrcp.pop %v360
      %v362 = vmul.f32 %v299, %v361
      %v363 = vadd.f32 %v359, 1e-07
      %v364 = vrcp.pop %v363
      %v365 = vmul.f32 %v299, %v364
      %v366 = vmul.f32 %v362, 2.0
      %v367 = vmul.f32 %v366, %v365
      %v368 = vadd.f32 %v362, %v365
      %v369 = vadd.f32 %v368, 1e-07
      %v370 = vrcp.pop %v369
      %v371 = vmul.f32 %v367, %v370
      %v372 = vmax.f32 %v371, 1e-07
      %v373 = vmin.f32 %v372, 0.9999999
      %vm374 = vcmask 2048
      %v375 = vsel %vm374, %v373, 0.0
      %376 = vadd.xlane.f32.xlu0 %v375
      %v377 = vpop.xlane.xlu0 %376
      %v378 = vrot.slane %v377, 4
      %v379 = vadd.f32 %v377, %v378
      %v380 = vrot.slane %v379, 2
      %v381 = vadd.f32 %v379, %v380
      %v382 = vrot.slane %v381, 1
      %v383 = vadd.f32 %v381, %v382
      %s384 = vtos %v383
      %v385 = vrcp.pop 3.0
      %s386 = vtos %v385
      %s387 = smul.f32 %s384, %s386
      %s388 = ssub.f32 1.0, %s387
      %v389 = vstv %s388
      %vm390 = vcmask 0
      %391 = vst.msk [vmem:[#allocation10] sm:$0x1] %vm390, %v389
    $region25: #{tpu_custom_call.1} parent=1 // pred_fallthru
      _
    // Predicated region
    $region26: #{tpu_custom_call.1} parent=1 // pred_check
      _
    $region27: #{tpu_custom_call.1} parent=1 // pred_check_branch
      %393 = sbr.rel (0) target = $region29
    $region28: #{tpu_custom_call.1} parent=1 // pred_region
      %s395 = ssub.s32 16, 16
      %396 = vsyncadd [#allocation7], %s395
      %s398 = sshll.u32 [#allocation10], 4
      %s399 = int_to_ptr.vmem [resolvable:$true] %s398
      %401 = dma.vmem_to_hbm [thread:$0]  %s399, 16, %s2, [#allocation7]
    $region29: #{tpu_custom_call.1} parent=1 // pred_fallthru
      _
    // Predicated region
    $region30: #{tpu_custom_call.1} parent=1 // pred_check
      _
    $region31: #{tpu_custom_call.1} parent=1 // pred_check_branch
      %403 = sbr.rel (0) target = $region33
    $region32: #{tpu_custom_call.1} parent=1 // pred_region
      %404 = dma.done [#allocation7], 16
    $region33: #{tpu_custom_call.1} parent=1 // pred_fallthru
      _
    %405 = vsyncpa [#allocation6], 1
    %406 = vsyncpa [#allocation9], 1
    %407 = vsyncpa [#allocation7], 1

</llo_original>
